<compile_context>
chip_gen: v6e
topology: v6e:2x2x1
jax: 0.10.0
libtpu: 0.0.40
codegen_flags: <defaults>
</compile_context>

<pallas_src>
import functools

import jax
import jax.numpy as jnp
from jax.experimental import pallas as pl
from jax.experimental.pallas import tpu as pltpu


# ---------------------------------------------------------------------------
# Kernel
# ---------------------------------------------------------------------------
def bottleneck_kernel(x_ref, w1_ref, b1_ref, w2_ref, b2_ref,
                      w3_ref, b3_ref, o_ref, *, img_h, img_w, roll_sign):
    """One grid step: bt whole images, channel-major (C, L), L = bt*H*W lanes."""
    x = x_ref[...]                                    # (Cin, L) f32
    L = x.shape[1]
    hw = img_h * img_w

    # ---- conv1 (1x1) + folded bn1 + relu --------------------------------
    h = jnp.dot(w1_ref[...], x.astype(jnp.bfloat16),
                preferred_element_type=jnp.float32)   # (Wp, L); pad rows -> 0
    h = jnp.maximum(h + b1_ref[...], 0.0)

    # ---- conv2 (3x3, stride=1, pad=1) + folded bn2 + relu ---------------
    # 9 shifted taps via lane rolls (XLU).  Sources outside the image
    # (border pixels / cross-image lanes / block wrap-around) are zeroed with
    # an in-kernel mask computed from the lane index -- no HBM mask input.
    # The center tap (delta == 0) needs no mask.  Each tap is cast to bf16 so
    # the dominant (9*Wp, L) stack is half-width and feeds the MXU directly.
    lane = jax.lax.broadcasted_iota(jnp.int32, (1, L), 1)
    pix = lane % hw
    hh = pix // img_w
    ww = pix % img_w

    taps = []
    for dh in (-1, 0, 1):
        for dw in (-1, 0, 1):
            delta = dh * img_w + dw                   # flat lane offset
            if delta == 0:
                taps.append(h.astype(jnp.bfloat16))   # center tap: all valid
                continue
            rolled = pltpu.roll(h, shift=(roll_sign * delta) % L, axis=1)
            valid = ((hh + dh >= 0) & (hh + dh < img_h) &
                     (ww + dw >= 0) & (ww + dw < img_w))
            taps.append(jnp.where(valid, rolled, 0.0).astype(jnp.bfloat16))
    # TODO(synk): on v6e/v7x the rolls themselves could run in bf16 to halve
    # XLU traffic further; kept f32 here for conservative lowering support.
    hstack = jnp.concatenate(taps, axis=0)            # (9*Wp, L) bf16
    h = jnp.dot(w2_ref[...], hstack,
                preferred_element_type=jnp.float32)   # (width, L)
    h = jnp.maximum(h + b2_ref[...], 0.0)

    # ---- conv3 (1x1) + folded bn3 ---------------------------------------
    h = jnp.dot(w3_ref[...], h.astype(jnp.bfloat16),
                preferred_element_type=jnp.float32)   # (Cout, L)
    h = h + b3_ref[...]

    # ---- identity residual (downsample=None, stride=1) + relu -----------
    o_ref[...] = jnp.maximum(h + x, 0.0)              # lane-dense store


@functools.lru_cache()
def _roll_sign():
    """Self-check of pltpu.roll's shift convention.

    Returns s such that pltpu.roll(x, shift=(s*d) % L, axis=-1)[..., p]
    equals x[..., (p + d) % L].
    """
    def probe(x_ref, o_ref):
        o_ref[...] = pltpu.roll(x_ref[...], shift=1, axis=1)

    x = jnp.tile(jnp.arange(128, dtype=jnp.float32)[None, :], (8, 1))
    y = pl.pallas_call(
        probe, out_shape=jax.ShapeDtypeStruct((8, 128), jnp.float32))(x)
    # np.roll convention (element i -> i+shift): y[:, 0] == 127  -> s = -1
    # opposite convention (y[p] = x[p+shift]):   y[:, 0] == 1    -> s = +1
    return -1 if int(y[0, 0]) == 127 else 1


# ---------------------------------------------------------------------------
# Wrapper-side parameter preparation (BN folding, layouts, zero-padding)
# ---------------------------------------------------------------------------
def prepare_params(w1t, bn1, w2t, bn2, w3t, bn3, eps=1e-5, sublanes=8):
    """Fold eval-mode BN into conv weights and reshape to kernel layouts."""
    def fold(p):
        gamma, beta, mean, var = p
        scale = gamma / jnp.sqrt(var + eps)
        return scale, beta - mean * scale

    width, cin = w1t.shape[0], w1t.shape[1]
    wp = ((width + sublanes - 1) // sublanes) * sublanes   # pad 4 -> 8 rows

    s1, sh1 = fold(bn1)
    s2, sh2 = fold(bn2)
    s3, sh3 = fold(bn3)

    # conv1: (Wp, Cin); output channels zero-padded so the conv2 tap stack is
    # sublane (8-row) aligned.
    w1 = w1t[:, :, 0, 0] * s1[:, None]
    w1 = jnp.pad(w1, ((0, wp - width), (0, 0))).astype(jnp.bfloat16)
    b1 = jnp.pad(sh1, (0, wp - width))[:, None].astype(jnp.float32)

    # conv2: (width, 9*Wp); column (tap*Wp + c) multiplies input channel c of
    # spatial tap (dh, dw), tap = (dh+1)*3 + (dw+1).
    w2 = jnp.transpose(w2t, (0, 2, 3, 1))                  # (O, 3, 3, I)
    w2 = jnp.pad(w2, ((0, 0), (0, 0), (0, 0), (0, wp - width)))
    w2 = (w2.reshape(width, 9 * wp) * s2[:, None]).astype(jnp.bfloat16)
    b2 = sh2[:, None].astype(jnp.float32)

    # conv3: (Cout, width)
    w3 = (w3t[:, :, 0, 0] * s3[:, None]).astype(jnp.bfloat16)
    b3 = sh3[:, None].astype(jnp.float32)
    return w1, b1, w2, b2, w3, b3, wp


def _pick_block_images(N, hw, bytes_per_lane, lane_target=2048,
                       vmem_budget=40 << 20):
    """Largest lane-aligned block of whole images that fits the VMEM budget.

    Prefers grid >= 2 (so v7x megacore can shard the batch axis), then the
    fattest block not exceeding lane_target lanes.
    """
    candidates = []
    for bt in range(1, N + 1):
        if N % bt:
            continue
        L = bt * hw
        if L % 128 != 0 and bt != N:      # (8,128) lane constraint
            continue
        if L * bytes_per_lane > vmem_budget:
            continue
        candidates.append(bt)
    if not candidates:
        return 1 if hw % 128 == 0 else N
    def score(bt):
        L = bt * hw
        grid = N // bt
        return (grid >= 2 and L >= 256,
                L <= lane_target,
                L if L <= lane_target else -L)
    return max(candidates, key=score)


# ---------------------------------------------------------------------------
# Forward wrapper
# ---------------------------------------------------------------------------
def bottleneck_forward(x_nchw, params, *, block_images=None, lane_target=2048):
    """x_nchw: (N, Cin, H, W) float32 -> (N, Cout, H, W) float32."""
    w1, b1, w2, b2, w3, b3, wp = params
    N, cin, H, W = x_nchw.shape
    cout, width = w3.shape
    assert cin == cout, "identity residual requires inplanes == planes*4"
    hw = H * W

    # Per-lane VMEM bytes: double-buffered x/out blocks + bf16 tap stack +
    # live f32 intermediates + slack.
    bytes_per_lane = (2 * (cin + cout) * 4 + 9 * wp * 2
                      + (cin + 4 * wp) * 4 + 64)
    bt = (block_images if block_images is not None
          else _pick_block_images(N, hw, bytes_per_lane, lane_target))
    assert N % bt == 0, "batch must be divisible by images-per-block"
    L = bt * hw                              # whole images per block (lanes)

    # channel-major: spatial+batch flattened onto the lane axis.
    x_cm = jnp.transpose(x_nchw.astype(jnp.float32),
                         (1, 0, 2, 3)).reshape(cin, N * hw)

    kernel = functools.partial(bottleneck_kernel, img_h=H, img_w=W,
                               roll_sign=_roll_sign())

    # Explicit VMEM limit: above the low scoped defaults (v5e: 16 MiB), but
    # well under v7x's 64 MiB physical VMEM.
    vmem_limit = int(min(max(2 * L * bytes_per_lane + (1 << 20), 16 << 20),
                         48 << 20))

    # TODO(synk): biases/weights could be packed into one input to save a few
    # tiny step-0 DMAs (low-priority per review).
    out_cm = pl.pallas_call(
        kernel,
        out_shape=jax.ShapeDtypeStruct((cout, N * hw), jnp.float32),
        grid_spec=pltpu.PrefetchScalarGridSpec(
            num_scalar_prefetch=0,
            grid=(N // bt,),
            in_specs=[
                pl.BlockSpec((cin, L), lambda n: (0, n)),        # x tile
                pl.BlockSpec((wp, cin), lambda n: (0, 0)),       # w1 (folded)
                pl.BlockSpec((wp, 1), lambda n: (0, 0)),         # b1
                pl.BlockSpec((width, 9 * wp), lambda n: (0, 0)), # w2 (folded)
                pl.BlockSpec((width, 1), lambda n: (0, 0)),      # b2
                pl.BlockSpec((cout, width), lambda n: (0, 0)),   # w3 (folded)
                pl.BlockSpec((cout, 1), lambda n: (0, 0)),       # b3
            ],
            out_specs=pl.BlockSpec((cout, L), lambda n: (0, n)),
        ),
        compiler_params=pltpu.CompilerParams(
            dimension_semantics=("parallel",),   # shard batch over v7x TCs
            vmem_limit_bytes=vmem_limit),
    )(x_cm, w1, b1, w2, b2, w3, b3)

    return jnp.transpose(out_cm.reshape(cout, N, H, W), (1, 0, 2, 3))


# ---------------------------------------------------------------------------
# Plain-JAX reference (PyTorch NCHW / OIHW conv semantics, eval-mode BN).
# ---------------------------------------------------------------------------
def ref_forward(x, w1t, bn1, w2t, bn2, w3t, bn3, eps=1e-5):
    def conv(a, w, pad):
        return jax.lax.conv_general_dilated(
            a, w, window_strides=(1, 1), padding=[(pad, pad), (pad, pad)],
            dimension_numbers=('NCHW', 'OIHW', 'NCHW'),
            precision=jax.lax.Precision.HIGHEST)

    def bn(a, p):
        gamma, beta, mean, var = p
        return ((a - mean[None, :, None, None])
                / jnp.sqrt(var[None, :, None, None] + eps)
                * gamma[None, :, None, None] + beta[None, :, None, None])

    out = jax.nn.relu(bn(conv(x, w1t, 0), bn1))
    out = jax.nn.relu(bn(conv(out, w2t, 1), bn2))
    out = bn(conv(out, w3t, 0), bn3)
    return jax.nn.relu(out + x)


if __name__ == "__main__":
    # Bottleneck(inplanes=16, planes=4): width = 4, out = planes*4 = 16.
    N, inplanes, H, W = 16, 16, 8, 8          # 16 images -> 1024 lanes total
    planes, expansion = 4, 4
    width = planes                            # base_width=64, groups=1
    cout = planes * expansion
    eps = 1e-5

    key = jax.random.PRNGKey(0)
    ks = jax.random.split(key, 16)

    x = jax.random.normal(ks[0], (N, inplanes, H, W), jnp.float32)

    # PyTorch-layout weights (OIHW) and eval-mode BatchNorm statistics.
    w1t = 0.1 * jax.random.normal(ks[1], (width, inplanes, 1, 1), jnp.float32)
    w2t = 0.1 * jax.random.normal(ks[2], (width, width, 3, 3), jnp.float32)
    w3t = 0.1 * jax.random.normal(ks[3], (cout, width, 1, 1), jnp.float32)

    def make_bn(kg, kb, km, kv, c):
        return (jax.random.uniform(kg, (c,), jnp.float32, 0.5, 1.5),   # gamma
                jax.random.normal(kb, (c,), jnp.float32),              # beta
                0.1 * jax.random.normal(km, (c,), jnp.float32),        # mean
                jax.random.uniform(kv, (c,), jnp.float32, 0.5, 1.5))   # var

    bn1 = make_bn(ks[4], ks[5], ks[6], ks[7], width)
    bn2 = make_bn(ks[8], ks[9], ks[10], ks[11], width)
    bn3 = make_bn(ks[12], ks[13], ks[14], ks[15], cout)

    params = prepare_params(w1t, bn1, w2t, bn2, w3t, bn3, eps=eps)
    out = jax.block_until_ready(bottleneck_forward(x, params))
    ref = jax.block_until_ready(
        ref_forward(x, w1t, bn1, w2t, bn2, w3t, bn3, eps=eps))

    assert out.shape == (N, cout, H, W)
    # bf16 MXU operands vs f32 reference -> widened tolerance.
    assert jnp.allclose(out, ref, rtol=3e-2, atol=4e-2), (
        float(jnp.max(jnp.abs(out - ref))))

    # TODO(synk): stride>1 / downsample branch not exercised (module defaults
    # stride=1, downsample=None => identity residual).
    print("KERNEL_OK")
</pallas_src>

<mosaic_0001>
module attributes {stable_mosaic.version = 11 : i64} {
  func.func @probe(%arg0: memref<8x128xf32, #tpu.memory_space<vmem>>, %arg1: memref<8x128xf32, #tpu.memory_space<vmem>>) attributes {dimension_semantics = [], scalar_prefetch = 0 : i64, scratch_operands = 0 : i64, tpu.core_type = #tpu.core_type<tc>} {
    %c0 = arith.constant 0 : index
    %c0_0 = arith.constant 0 : index
    %0 = vector.load %arg0[%c0, %c0_0] : memref<8x128xf32, #tpu.memory_space<vmem>>, vector<8x128xf32>
    %c1_i32 = arith.constant 1 : i32
    %1 = tpu.dynamic_rotate %0 by %c1_i32 dim 1 : vector<8x128xf32>, i32 -> vector<8x128xf32>
    %c0_1 = arith.constant 0 : index
    %c0_2 = arith.constant 0 : index
    %2 = vector.load %arg1[%c0_1, %c0_2] : memref<8x128xf32, #tpu.memory_space<vmem>>, vector<8x128xf32>
    tpu.vector_store %arg1[%c0_1, %c0_2], %1 {strides = array<i32>} : memref<8x128xf32, #tpu.memory_space<vmem>>, vector<8x128xf32>,
    return
  }
}

</mosaic_0001>

<llo_original>
// kernel: tpu_custom_call.1
$region0: #{tpu_custom_call.1}
  #allocation0 [shape = 'u32[]', space=smem, size = 0x4, offset = 0x4, fixed_abs, tag = 'smem constant byte address 0x4 - core index']
  #allocation1 [shape = 'u32[144,128]{1,0:T(1,128)}', space=vmem, size = 0x12000, scoped, tag = 'internal scratch']
  %s0 = inlined_call_operand.hbm [shape: f32[8,128], index: 0, kind: input, shape index: {}]
  %s1 = inlined_call_operand.hbm [shape: f32[8,128], index: 1, kind: output, shape index: {}]
  %s2 = sld [smem:[#allocation0]]
  $region18: #{tpu_custom_call.1} parent=0
    _
  %s4 = ssub.s32 1, %s2
  %s5 = scalar_select 0, %s4, %s2
  $region1: #{tpu_custom_call.1} parent=0
    #allocation2 [shape = 'u8[4096]{0}', space=vmem, size = 0x1000, scoped, tag = 'input window, operand 0, single buffered']
    #allocation3 [shape = 's32[1]{0}', space=sflag, size = 0x4, scoped, tag = 'scoped memory for tpu_custom_call.1']
    #allocation4 [shape = 's32[1]{0}', space=sflag, size = 0x4, scoped, tag = 'scoped memory for tpu_custom_call.1']
    #allocation5 [shape = 'u8[4096]{0}', space=vmem, size = 0x1000, scoped, tag = 'output window, operand 0, single buffered']
    %6 = vsyncpa [#allocation3], 0
    %7 = vsyncpa [#allocation4], 0
    // Predicated region
    $region2: #{tpu_custom_call.1} parent=1 // pred_check
      _
    $region3: #{tpu_custom_call.1} parent=1 // pred_check_branch
      %9 = sbr.rel (0) target = $region5
    $region4: #{tpu_custom_call.1} parent=1 // pred_region
      %s11 = ssub.s32 128, 128
      %12 = vsyncadd [#allocation3], %s11
      %s14 = sshll.u32 [#allocation2], 4
      %s15 = int_to_ptr.vmem [resolvable:$true] %s14
      %17 = dma.hbm_to_vmem [thread:$0]  %s0, 128, %s15, [#allocation3]
    $region5: #{tpu_custom_call.1} parent=1 // pred_fallthru
      _
    // Predicated region
    $region6: #{tpu_custom_call.1} parent=1 // pred_check
      _
    $region7: #{tpu_custom_call.1} parent=1 // pred_check_branch
      %19 = sbr.rel (0) target = $region9
    $region8: #{tpu_custom_call.1} parent=1 // pred_region
      %20 = dma.done [#allocation3], 128
    $region9: #{tpu_custom_call.1} parent=1 // pred_fallthru
      _
    %v21 = vld [vmem:[#allocation2] sm:$0xff]
    %22 = vrot.lane.b32.xlu0 %v21, 1
    %v23 = vpop.permute.xlu0 %22
    %24 = vst [vmem:[#allocation5] sm:$0xff] %v23
    // Predicated region
    $region10: #{tpu_custom_call.1} parent=1 // pred_check
      _
    $region11: #{tpu_custom_call.1} parent=1 // pred_check_branch
      %26 = sbr.rel (0) target = $region13
    $region12: #{tpu_custom_call.1} parent=1 // pred_region
      %s28 = ssub.s32 128, 128
      %29 = vsyncadd [#allocation4], %s28
      %s31 = sshll.u32 [#allocation5], 4
      %s32 = int_to_ptr.vmem [resolvable:$true] %s31
      %34 = dma.vmem_to_hbm [thread:$0]  %s32, 128, %s1, [#allocation4]
    $region13: #{tpu_custom_call.1} parent=1 // pred_fallthru
      _
    // Predicated region
    $region14: #{tpu_custom_call.1} parent=1 // pred_check
      _
    $region15: #{tpu_custom_call.1} parent=1 // pred_check_branch
      %36 = sbr.rel (0) target = $region17
    $region16: #{tpu_custom_call.1} parent=1 // pred_region
      %37 = dma.done [#allocation4], 128
    $region17: #{tpu_custom_call.1} parent=1 // pred_fallthru
      _
    %38 = vsyncpa [#allocation3], 1
    %39 = vsyncpa [#allocation4], 1

</llo_original>
